<compile_context>
chip_gen: v7x
topology: tpu7x:2x2x1
jax: 0.10.0
libtpu: 0.0.40
codegen_flags: <defaults>
</compile_context>

<pallas_src>
import jax
import jax.numpy as jnp
from jax.experimental import pallas as pl
from jax.experimental.pallas import tpu as pltpu


def _round_up(n, m):
    return ((n + m - 1) // m) * m


def _pick_tile(total, unit, max_tile):
    """Largest multiple of `unit` <= max_tile that divides the padded total."""
    padded = _round_up(total, unit)
    n_units = padded // unit
    best = unit
    for k in range(1, n_units + 1):
        t = unit * k
        if t > max_tile:
            break
        if n_units % k == 0:
            best = t
    return best, padded


# ---------------------------------------------------------------------------
# Kernel 1: squeeze — per-(b,c) spatial sum, accumulated across HW tiles.
# ---------------------------------------------------------------------------
def _pool_kernel(x_ref, sum_ref):
    # Reduction axis (HW tiles) is the last grid axis; the output block is
    # resident across it, so accumulate in place (P3 pattern).
    @pl.when(pl.program_id(1) == 0)
    def _():
        sum_ref[...] = jnp.zeros_like(sum_ref)

    sum_ref[...] += jnp.sum(x_ref[...], axis=-1, keepdims=True)


# ---------------------------------------------------------------------------
# Kernel 2: scale — broadcast the per-row gate over the spatial (lane) axis.
# ---------------------------------------------------------------------------
def _scale_kernel(x_ref, s_ref, o_ref):
    o_ref[...] = x_ref[...] * s_ref[...]


def se_module(x_nchw, w1, b1, w2, b2, *, row_tile_max=256, hw_tile_max=2048):
    """Squeeze-and-Excitation forward.  x_nchw: (B, C, H, W) float32."""
    B, C, H, W = x_nchw.shape
    HW = H * W
    BC = B * C

    # Lane-dense tiling: HW tiles are multiples of 128, row tiles multiples of 8.
    hw_tile, L = _pick_tile(HW, 128, hw_tile_max)
    row_tile, R = _pick_tile(BC, 8, row_tile_max)
    grid_rows = R // row_tile
    grid_cols = L // hw_tile

    x2d = x_nchw.reshape(BC, HW)
    x_pad = x2d
    if (R, L) != (BC, HW):
        x_pad = jnp.pad(x2d, ((0, R - BC), (0, L - HW)))  # zeros keep sums exact

    vmem_limit = 32 * 1024 * 1024  # safe on v5e/v6e/v7x; working set ~8 MiB

    # --- Squeeze: per-row spatial sums via a pipelined Pallas reduction. ---
    row_sums = pl.pallas_call(
        _pool_kernel,
        out_shape=jax.ShapeDtypeStruct((R, 1), jnp.float32),
        grid_spec=pltpu.PrefetchScalarGridSpec(
            num_scalar_prefetch=0,
            grid=(grid_rows, grid_cols),
            in_specs=[pl.BlockSpec((row_tile, hw_tile), lambda i, j: (i, j))],
            out_specs=pl.BlockSpec((row_tile, 1), lambda i, j: (i, 0)),
        ),
        compiler_params=pltpu.CompilerParams(
            dimension_semantics=("parallel", "arbitrary"),
            vmem_limit_bytes=vmem_limit),
    )(x_pad)

    # --- Excitation gate (tiny matmuls) in plain JAX, off the streaming path. ---
    pooled = row_sums[:BC, 0].reshape(B, C) * (1.0 / HW)
    h = jax.nn.relu(pooled @ w1 + b1[0])
    s = jax.nn.sigmoid(h @ w2 + b2[0])                   # (B, C)
    s_rows = s.reshape(BC, 1).astype(x_pad.dtype)
    if R != BC:
        s_rows = jnp.pad(s_rows, ((0, R - BC), (0, 0)))

    # --- Scale: streaming, lane-dense elementwise multiply (mem-bound). ---
    out_pad = pl.pallas_call(
        _scale_kernel,
        out_shape=jax.ShapeDtypeStruct((R, L), x_pad.dtype),
        grid_spec=pltpu.PrefetchScalarGridSpec(
            num_scalar_prefetch=0,
            grid=(grid_rows, grid_cols),
            in_specs=[
                pl.BlockSpec((row_tile, hw_tile), lambda i, j: (i, j)),
                pl.BlockSpec((row_tile, 1), lambda i, j: (i, 0)),
            ],
            out_specs=pl.BlockSpec((row_tile, hw_tile), lambda i, j: (i, j)),
        ),
        compiler_params=pltpu.CompilerParams(
            dimension_semantics=("parallel", "parallel"),
            vmem_limit_bytes=vmem_limit),
    )(x_pad, s_rows)

    return out_pad[:BC, :HW].reshape(B, C, H, W)


def se_module_ref(x_nchw, w1, b1, w2, b2):
    """Pure-JAX reference mirroring the PyTorch forward."""
    pooled = jnp.mean(x_nchw, axis=(2, 3))               # avg_pool2d over full H,W
    h = jax.nn.relu(pooled @ w1 + b1[0])
    s = jax.nn.sigmoid(h @ w2 + b2[0])
    return x_nchw * s[:, :, None, None]


if __name__ == "__main__":
    # Small shapes consistent with the module.
    B, C, H, W = 2, 4, 16, 16
    reduction_ratio = 2
    Cr = C // reduction_ratio

    key = jax.random.PRNGKey(0)
    kx, k1, k2, k3, k4 = jax.random.split(key, 5)

    x = jax.random.normal(kx, (B, C, H, W), dtype=jnp.float32)

    # Deterministic synthetic parameters (stored (in, out) + (1, out) bias).
    w1 = jax.random.normal(k1, (C, Cr), dtype=jnp.float32) * 0.5
    b1 = jax.random.normal(k2, (1, Cr), dtype=jnp.float32) * 0.1
    w2 = jax.random.normal(k3, (Cr, C), dtype=jnp.float32) * 0.5
    b2 = jax.random.normal(k4, (1, C), dtype=jnp.float32) * 0.1

    ref = se_module_ref(x, w1, b1, w2, b2)

    # Default (largest-fitting) tiles.
    out = jax.block_until_ready(se_module(x, w1, b1, w2, b2))
    assert out.shape == (B, C, H, W)
    assert jnp.allclose(out, ref, atol=1e-5, rtol=1e-5), "mismatch vs reference"

    # Also exercise the multi-HW-tile reduction/pipelining path.
    out_tiled = jax.block_until_ready(
        se_module(x, w1, b1, w2, b2, row_tile_max=8, hw_tile_max=128))
    assert jnp.allclose(out_tiled, ref, atol=1e-5, rtol=1e-5), "tiled mismatch"

    print("KERNEL_OK")
</pallas_src>

<mosaic_0001>
module attributes {stable_mosaic.version = 11 : i64} {
  func.func @_pool_kernel(%arg0: i32, %arg1: i32, %arg2: memref<8x256xf32, #tpu.memory_space<vmem>>, %arg3: memref<8x1xf32, #tpu.memory_space<vmem>>) attributes {dimension_semantics = [#tpu.dimension_semantics<parallel>, #tpu.dimension_semantics<arbitrary>], iteration_bounds = array<i64: 1, 1>, scalar_prefetch = 0 : i64, scratch_operands = 0 : i64, tpu.core_type = #tpu.core_type<tc>, window_params = [{transform_indices = @transform_0, window_bounds = array<i64: 8, 256>}, {transform_indices = @transform_1, window_bounds = array<i64: 8, 1>}]} {
    %c0_i32 = arith.constant 0 : i32
    %0 = arith.cmpi eq, %arg1, %c0_i32 : i32
    %1 = arith.extui %0 : i1 to i32
    %c0_i32_0 = arith.constant 0 : i32
    %2 = arith.cmpi ne, %1, %c0_i32_0 : i32
    scf.if %2 {
      %cst_6 = arith.constant 0.000000e+00 : f32
      %9 = vector.broadcast %cst_6 : f32 to vector<8x1xf32>
      %c0_7 = arith.constant 0 : index
      %c0_8 = arith.constant 0 : index
      %10 = vector.load %arg3[%c0_7, %c0_8] : memref<8x1xf32, #tpu.memory_space<vmem>>, vector<8x1xf32>
      tpu.vector_store %arg3[%c0_7, %c0_8], %9 {strides = array<i32>} : memref<8x1xf32, #tpu.memory_space<vmem>>, vector<8x1xf32>,
    } else {
    }
    %c0 = arith.constant 0 : index
    %c0_1 = arith.constant 0 : index
    %3 = vector.load %arg3[%c0, %c0_1] : memref<8x1xf32, #tpu.memory_space<vmem>>, vector<8x1xf32>
    %c0_2 = arith.constant 0 : index
    %c0_3 = arith.constant 0 : index
    %4 = vector.load %arg2[%c0_2, %c0_3] : memref<8x256xf32, #tpu.memory_space<vmem>>, vector<8x256xf32>
    %cst = arith.constant dense<0.000000e+00> : vector<8xf32>
    %5 = vector.multi_reduction <add>, %4, %cst [1] : vector<8x256xf32> to vector<8xf32>
    %6 = vector.shape_cast %5 : vector<8xf32> to vector<8x1xf32>
    %7 = arith.addf %3, %6 : vector<8x1xf32>
    %c0_4 = arith.constant 0 : index
    %c0_5 = arith.constant 0 : index
    %8 = vector.load %arg3[%c0_4, %c0_5] : memref<8x1xf32, #tpu.memory_space<vmem>>, vector<8x1xf32>
    tpu.vector_store %arg3[%c0_4, %c0_5], %7 {strides = array<i32>} : memref<8x1xf32, #tpu.memory_space<vmem>>, vector<8x1xf32>,
    return
  }
  func.func @transform_0(%arg0: i32, %arg1: i32) -> (i32, i32) {
    %c0_i32 = arith.constant 0 : i32
    return %arg0, %arg1 : i32, i32
  }
  func.func @transform_1(%arg0: i32, %arg1: i32) -> (i32, i32) {
    %c0_i32 = arith.constant 0 : i32
    %c0_i32_0 = arith.constant 0 : i32
    return %arg0, %c0_i32 : i32, i32
  }
}

</mosaic_0001>

<llo_original>
// kernel: tpu_custom_call.1
$region0: #{tpu_custom_call.1}
  #allocation0 [shape = 'u32[]', space=smem, size = 0x4, offset = 0x4, fixed_abs, tag = 'smem constant byte address 0x4 - core index']
  #allocation1 [shape = 'u32[144,128]{1,0:T(1,128)}', space=vmem, size = 0x12000, scoped, tag = 'internal scratch']
  %s0 = inlined_call_operand.hbm [shape: f32[8,256], index: 0, kind: input, shape index: {}]
  %s1 = inlined_call_operand.vmem [shape: f32[8,1], index: 1, kind: output, shape index: {}]
  %s2 = sld [smem:[#allocation0]]
  $region22: #{tpu_custom_call.1} parent=0
    _
  %s4 = ssub.s32 1, %s2
  %s5 = scalar_select 0, %s4, %s2
  $region1: #{tpu_custom_call.1} parent=0
    #allocation2 [shape = 'u8[8192]{0}', space=vmem, size = 0x2000, scoped, tag = 'input window, operand 0, single buffered']
    #allocation3 [shape = 's32[1]{0}', space=sflag, size = 0x4, scoped, tag = 'scoped memory for tpu_custom_call.1']
    %6 = vsyncpa [#allocation3], 0
    // Predicated region
    $region2: #{tpu_custom_call.1} parent=1 // pred_check
      _
    $region3: #{tpu_custom_call.1} parent=1 // pred_check_branch
      %8 = sbr.rel (0) target = $region5
    $region4: #{tpu_custom_call.1} parent=1 // pred_region
      %s10 = ssub.s32 256, 256
      %11 = vsyncadd [#allocation3], %s10
      %s13 = sshll.u32 [#allocation2], 4
      %s14 = int_to_ptr.vmem [resolvable:$true] %s13
      %16 = dma.hbm_to_vmem [thread:$0]  %s0, 256, %s14, [#allocation3]
    $region5: #{tpu_custom_call.1} parent=1 // pred_fallthru
      _
    // Predicated region
    $region6: #{tpu_custom_call.1} parent=1 // pred_check
      _
    $region7: #{tpu_custom_call.1} parent=1 // pred_check_branch
      %18 = sbr.rel (0) target = $region9
    $region8: #{tpu_custom_call.1} parent=1 // pred_region
      %19 = dma.done [#allocation3], 256
    $region9: #{tpu_custom_call.1} parent=1 // pred_fallthru
      _
    %p20 = scmp.eq.s32.totalorder 0, 0
    // Predicated region
    $region10: #{tpu_custom_call.1} parent=1 // pred_check
      %p21 = pneg %p20
    $region11: #{tpu_custom_call.1} parent=1 // pred_check_branch
      %23 = sbr.rel (%p21) target = $region13
    $region12: #{tpu_custom_call.1} parent=1 // pred_region
      %vm24 = vcmask 7168
      %25 = vst.msk [vmem:[%s1] sm:$0xff] %vm24, 0.0
    $region13: #{tpu_custom_call.1} parent=1 // pred_fallthru
      _
    %v26 = vld [vmem:[%s1] sm:$0xff]
    %v27 = vld [vmem:[#allocation2] sm:$0xff]
    %v28 = vld [vmem:[#allocation2 + $0x8] sm:$0xff]
    %v29 = vadd.f32 %v27, %v28
    %30 = vadd.xlane.f32.xlu0 %v29
    %v31 = vpop.xlane.xlu0 %30
    %v32 = vadd.f32 %v26, %v31
    %vm33 = vcmask 7168
    %34 = vst.msk [vmem:[%s1] sm:$0xff] %vm33, %v32
    // Predicated region
    $region14: #{tpu_custom_call.1} parent=1 // pred_check
      _
    $region15: #{tpu_custom_call.1} parent=1 // pred_check_branch
      %36 = sbr.rel (0) target = $region17
    $region16: #{tpu_custom_call.1} parent=1 // pred_region
      _
    $region17: #{tpu_custom_call.1} parent=1 // pred_fallthru
      _
    // Predicated region
    $region18: #{tpu_custom_call.1} parent=1 // pred_check
      _
    $region19: #{tpu_custom_call.1} parent=1 // pred_check_branch
      %38 = sbr.rel (0) target = $region21
    $region20: #{tpu_custom_call.1} parent=1 // pred_region
      _
    $region21: #{tpu_custom_call.1} parent=1 // pred_fallthru
      _
    %39 = vsyncpa [#allocation3], 1

</llo_original>
